<compile_context>
chip_gen: v6e
topology: v6e:2x2x1
jax: 0.10.0
libtpu: 0.0.40
codegen_flags: <defaults>
</compile_context>

<pallas_src>
import functools

import jax
import jax.numpy as jnp
from jax.experimental import pallas as pl
from jax.experimental.pallas import tpu as pltpu


def _row_sum_bce_kernel(x_ref, t_ref, o_ref, *, lane_tile, l_total, mask_lanes,
                        out_width):
    """Accumulate per-row partial sums of BCE-with-logits loss over lane tiles."""
    j = pl.program_id(1)  # lane-tile index (reduction axis, last in grid)

    @pl.when(j == 0)
    def _():
        o_ref[...] = jnp.zeros_like(o_ref)

    def loss_tile():
        x = x_ref[...].astype(jnp.float32)
        t = t_ref[...].astype(jnp.float32)
        # BCEWithLogitsLoss(reduction='none'), numerically stable form.
        return jnp.maximum(x, 0.0) - x * t + jnp.log1p(jnp.exp(-jnp.abs(x)))

    def reduce_to_out(loss):
        if out_width == 1:
            # Rare path (lane tile < 128 or not a multiple of 128).
            return jnp.sum(loss, axis=-1, keepdims=True)
        # Lane-dense path: 128-lane-aligned VALU adds, no XLU cross-lane
        # reduce and no lane-width-1 masked stores in the hot loop.
        acc = loss[:, 0:128]
        for k in range(1, lane_tile // 128):
            acc = acc + loss[:, k * 128:(k + 1) * 128]
        return acc

    if not mask_lanes:
        o_ref[...] += reduce_to_out(loss_tile())
    else:
        last = pl.num_programs(1) - 1

        @pl.when(j < last)
        def _():
            # Hot path: no iota/compare/select.
            o_ref[...] += reduce_to_out(loss_tile())

        @pl.when(j == last)
        def _():
            # Mask the LOSS (not the inputs: BCE(0,0) = log 2 != 0) on the
            # padded tail lanes only.
            loss = loss_tile()
            lane = jax.lax.broadcasted_iota(jnp.int32, loss.shape, 1) + j * lane_tile
            loss = jnp.where(lane < l_total, loss, 0.0)
            o_ref[...] += reduce_to_out(loss)


def _pick_tiles(r, l, min_itemsize, *, max_lane_tile=8192,
                target_tile_bytes=4 * 1024 * 1024):
    """Choose (row_tile, lane_tile, mask_lanes).

    Lane tile: full spatial extent when it fits (contiguous DMA, no mask, no
    lane grid axis); otherwise a large multiple of 128 with a masked tail.
    Row tile: grown until ~target_tile_bytes per input tile (4 MiB keeps
    2 inputs x 2 pipeline buffers = 16 MiB, safe for v7x's 64 MiB VMEM while
    being at ~85%+ of HBM roofline), kept sublane-aligned for the narrowest
    input dtype, and capped so there are >= 2 row tiles for the 2-TC split.
    """
    if l <= max_lane_tile:
        tl = l
        mask_lanes = False
    else:
        tl = max_lane_tile                       # multiple of 128
        mask_lanes = (l % tl) != 0

    align = max(8, 32 // max(1, min_itemsize))   # 8 (f32) / 16 (bf16) / 32 (i8)
    if r <= align:
        tr = r                                   # full-dim block: always legal
    else:
        max_rows_bytes = max(align, target_tile_bytes // (tl * 4))
        max_rows_split = max(align, r // 2)      # keep >= 2 row tiles (megacore)
        tr = min(r, max_rows_bytes, max_rows_split)
        tr = max(align, (tr // align) * align)
    return tr, tl, mask_lanes


def binary_loss_weighted(inp, target, weight):
    """inp, target: (N, C, H, W); weight: (C,). Returns scalar f32."""
    assert inp.ndim == 4 and target.shape == inp.shape
    n, c, h, w = inp.shape
    r = n * c        # rows: one per (sample, channel)
    l = h * w        # lanes: spatial reduction axis
    m = n * h * w    # per-channel element count (mean divisor)

    # Free, contiguous views -- no extra HBM transpose pass. Keep native
    # dtypes (bf16/int8 inputs stream fewer bytes); f32 compute is in-kernel.
    x2 = inp.reshape(r, l)
    t2 = target.reshape(r, l)

    min_itemsize = min(jnp.dtype(inp.dtype).itemsize,
                       jnp.dtype(target.dtype).itemsize)
    tr, tl, mask_lanes = _pick_tiles(r, l, min_itemsize)
    out_width = 128 if (tl >= 128 and tl % 128 == 0) else 1

    n_row = pl.cdiv(r, tr)
    n_lane = pl.cdiv(l, tl)
    r_pad = n_row * tr           # no partial *output* blocks; extra rows discarded

    row_sums = pl.pallas_call(
        functools.partial(
            _row_sum_bce_kernel,
            lane_tile=tl, l_total=l, mask_lanes=mask_lanes, out_width=out_width,
        ),
        out_shape=jax.ShapeDtypeStruct((r_pad, out_width), jnp.float32),
        grid_spec=pltpu.PrefetchScalarGridSpec(
            num_scalar_prefetch=0,
            grid=(n_row, n_lane),       # reduction (lane) axis last
            in_specs=[
                pl.BlockSpec((tr, tl), lambda i, j: (i, j)),
                pl.BlockSpec((tr, tl), lambda i, j: (i, j)),
            ],
            out_specs=pl.BlockSpec((tr, out_width), lambda i, j: (i, 0)),
        ),
        compiler_params=pltpu.CompilerParams(
            dimension_semantics=("parallel", "arbitrary"),
            # ~4 MiB/input tile x 2 inputs x 2 pipeline buffers = ~16 MiB of
            # input buffers; 48 MiB leaves headroom on every generation
            # (v7x has only 64 MiB physical VMEM per TensorCore).
            vmem_limit_bytes=48 * 1024 * 1024,
        ),
    )(x2, t2)

    # Tiny O(N*C) follow-up: lane partials -> per-row sums -> per-channel
    # means -> weighted scalar.
    per_row = row_sums[:r].sum(axis=-1)                     # (N*C,)
    per_channel = per_row.reshape(n, c).sum(axis=0) / jnp.float32(m)
    wf = weight.astype(jnp.float32)
    return jnp.sum(per_channel * wf) / jnp.sum(wf)


def _reference(inp, target, weight):
    x = inp.astype(jnp.float32)
    t = target.astype(jnp.float32)
    loss = jnp.maximum(x, 0.0) - x * t + jnp.log1p(jnp.exp(-jnp.abs(x)))
    per_c = loss.mean(axis=(0, 2, 3))
    return jnp.sum(per_c * weight.astype(jnp.float32)) / jnp.sum(
        weight.astype(jnp.float32))


if __name__ == "__main__":
    key = jax.random.PRNGKey(0)
    k1, k2, k3 = jax.random.split(key, 3)

    N, C, H, W = 2, 4, 16, 16
    inp = jax.random.normal(k1, (N, C, H, W), dtype=jnp.float32)            # logits
    target = (jax.random.uniform(k2, (N, C, H, W)) > 0.5).astype(jnp.float32)
    weight = jax.random.uniform(k3, (C,), dtype=jnp.float32) + 0.1

    out = jax.jit(binary_loss_weighted)(inp, target, weight)
    out = jax.block_until_ready(out)

    ref = _reference(inp, target, weight)
    assert jnp.allclose(out, ref, rtol=1e-5, atol=1e-5), (out, ref)

    print("KERNEL_OK")
</pallas_src>

<mosaic_0001>
module attributes {stable_mosaic.version = 11 : i64} {
  func.func @_row_sum_bce_kernel(%arg0: i32, %arg1: i32, %arg2: memref<8x256xf32, #tpu.memory_space<vmem>>, %arg3: memref<8x256xf32, #tpu.memory_space<vmem>>, %arg4: memref<8x128xf32, #tpu.memory_space<vmem>>) attributes {dimension_semantics = [#tpu.dimension_semantics<parallel>, #tpu.dimension_semantics<arbitrary>], iteration_bounds = array<i64: 1, 1>, scalar_prefetch = 0 : i64, scratch_operands = 0 : i64, tpu.core_type = #tpu.core_type<tc>, window_params = [{transform_indices = @transform_0, window_bounds = array<i64: 8, 256>}, {transform_indices = @transform_1, window_bounds = array<i64: 8, 256>}, {transform_indices = @transform_2, window_bounds = array<i64: 8, 128>}]} {
    %c0_i32 = arith.constant 0 : i32
    %0 = arith.cmpi eq, %arg1, %c0_i32 : i32
    %1 = arith.extui %0 : i1 to i32
    %c0_i32_0 = arith.constant 0 : i32
    %2 = arith.cmpi ne, %1, %c0_i32_0 : i32
    scf.if %2 {
      %cst_9 = arith.constant 0.000000e+00 : f32
      %21 = vector.broadcast %cst_9 : f32 to vector<8x128xf32>
      %c0_10 = arith.constant 0 : index
      %c0_11 = arith.constant 0 : index
      %22 = vector.load %arg4[%c0_10, %c0_11] : memref<8x128xf32, #tpu.memory_space<vmem>>, vector<8x128xf32>
      tpu.vector_store %arg4[%c0_10, %c0_11], %21 {strides = array<i32>} : memref<8x128xf32, #tpu.memory_space<vmem>>, vector<8x128xf32>,
    } else {
    }
    %c0 = arith.constant 0 : index
    %c0_1 = arith.constant 0 : index
    %3 = vector.load %arg4[%c0, %c0_1] : memref<8x128xf32, #tpu.memory_space<vmem>>, vector<8x128xf32>
    %c0_2 = arith.constant 0 : index
    %c0_3 = arith.constant 0 : index
    %4 = vector.load %arg2[%c0_2, %c0_3] : memref<8x256xf32, #tpu.memory_space<vmem>>, vector<8x256xf32>
    %c0_4 = arith.constant 0 : index
    %c0_5 = arith.constant 0 : index
    %5 = vector.load %arg3[%c0_4, %c0_5] : memref<8x256xf32, #tpu.memory_space<vmem>>, vector<8x256xf32>
    %cst = arith.constant 0.000000e+00 : f32
    %6 = vector.broadcast %cst : f32 to vector<8x256xf32>
    %7 = arith.maximumf %4, %6 : vector<8x256xf32>
    %8 = arith.mulf %4, %5 : vector<8x256xf32>
    %9 = arith.subf %7, %8 : vector<8x256xf32>
    %10 = math.absf %4 : vector<8x256xf32>
    %cst_6 = arith.constant 0.000000e+00 : f32
    %11 = vector.broadcast %cst_6 : f32 to vector<8x256xf32>
    %12 = arith.subf %11, %10 : vector<8x256xf32>
    %13 = math.exp %12 : vector<8x256xf32>
    %14 = math.log1p %13 : vector<8x256xf32>
    %15 = arith.addf %9, %14 : vector<8x256xf32>
    %16 = vector.extract_strided_slice %15 {offsets = [0, 0], sizes = [8, 128], strides = [1, 1]} : vector<8x256xf32> to vector<8x128xf32>
    %17 = vector.extract_strided_slice %15 {offsets = [0, 128], sizes = [8, 128], strides = [1, 1]} : vector<8x256xf32> to vector<8x128xf32>
    %18 = arith.addf %16, %17 : vector<8x128xf32>
    %19 = arith.addf %3, %18 : vector<8x128xf32>
    %c0_7 = arith.constant 0 : index
    %c0_8 = arith.constant 0 : index
    %20 = vector.load %arg4[%c0_7, %c0_8] : memref<8x128xf32, #tpu.memory_space<vmem>>, vector<8x128xf32>
    tpu.vector_store %arg4[%c0_7, %c0_8], %19 {strides = array<i32>} : memref<8x128xf32, #tpu.memory_space<vmem>>, vector<8x128xf32>,
    return
  }
  func.func @transform_0(%arg0: i32, %arg1: i32) -> (i32, i32) {
    %c0_i32 = arith.constant 0 : i32
    return %arg0, %arg1 : i32, i32
  }
  func.func @transform_1(%arg0: i32, %arg1: i32) -> (i32, i32) {
    %c0_i32 = arith.constant 0 : i32
    return %arg0, %arg1 : i32, i32
  }
  func.func @transform_2(%arg0: i32, %arg1: i32) -> (i32, i32) {
    %c0_i32 = arith.constant 0 : i32
    %c0_i32_0 = arith.constant 0 : i32
    return %arg0, %c0_i32 : i32, i32
  }
}

</mosaic_0001>

<llo_original>
// kernel: binary_loss_weighted.1
$region0: #{binary_loss_weighted.1}
  #allocation0 [shape = 'u32[]', space=smem, size = 0x4, offset = 0x4, fixed_abs, tag = 'smem constant byte address 0x4 - core index']
  #allocation1 [shape = 'u32[144,128]{1,0:T(1,128)}', space=vmem, size = 0x12000, scoped, tag = 'internal scratch']
  %s0 = inlined_call_operand.vmem [shape: f32[8,256], index: 0, kind: input, shape index: {}]
  %s1 = inlined_call_operand.vmem [shape: f32[8,256], index: 1, kind: input, shape index: {}]
  %s2 = inlined_call_operand.vmem [shape: f32[8,128], index: 2, kind: output, shape index: {}]
  %s3 = sld [smem:[#allocation0]]
  $region22: #{binary_loss_weighted.1} parent=0
    _
  %s5 = ssub.s32 1, %s3
  %s6 = scalar_select 0, %s5, %s3
  // Predicated region
  $region2: #{binary_loss_weighted.1} parent=0 // pred_check
    _
  $region3: #{binary_loss_weighted.1} parent=0 // pred_check_branch
    %8 = sbr.rel (0) target = $region5
  $region4: #{binary_loss_weighted.1} parent=0 // pred_region
    _
  $region5: #{binary_loss_weighted.1} parent=0 // pred_fallthru
    _
  // Predicated region
  $region6: #{binary_loss_weighted.1} parent=0 // pred_check
    _
  $region7: #{binary_loss_weighted.1} parent=0 // pred_check_branch
    %10 = sbr.rel (0) target = $region9
  $region8: #{binary_loss_weighted.1} parent=0 // pred_region
    _
  $region9: #{binary_loss_weighted.1} parent=0 // pred_fallthru
    _
  %p11 = scmp.eq.s32.totalorder 0, 0
  // Predicated region
  $region10: #{binary_loss_weighted.1} parent=0 // pred_check
    %p12 = pneg %p11
  $region11: #{binary_loss_weighted.1} parent=0 // pred_check_branch
    %14 = sbr.rel (%p12) target = $region13
  $region12: #{binary_loss_weighted.1} parent=0 // pred_region
    %15 = vst [vmem:[%s2] sm:$0xff] 0.0
  $region13: #{binary_loss_weighted.1} parent=0 // pred_fallthru
    _
  %v16 = vld [vmem:[%s2] sm:$0xff]
  %v17 = vld [vmem:[%s0] sm:$0xff]
  %v18 = vld [vmem:[%s0 + $0x8] sm:$0xff]
  %v19 = vld [vmem:[%s1] sm:$0xff]
  %v20 = vld [vmem:[%s1 + $0x8] sm:$0xff]
  %v21 = vmax.f32 %v17, 0.0
  %v22 = vmax.f32 %v18, 0.0
  %v23 = vmul.f32 %v17, %v19
  %v24 = vmul.f32 %v18, %v20
  %v25 = vsub.f32 %v21, %v23
  %v26 = vsub.f32 %v22, %v24
  %v27 = vand.u32 2147483647, %v17
  %v28 = vand.u32 2147483647, %v18
  %v29 = vsub.f32 0.0, %v27
  %v30 = vsub.f32 0.0, %v28
  %v31 = vmul.f32 %v29, 1.442695
  %v32 = vpow.pop %v31
  %v33 = vmul.f32 %v30, 1.442695
  %v34 = vpow.pop %v33
  %v35 = vadd.f32 %v32, 1.0
  %v36 = vlog2.pop %v35
  %v37 = vmul.f32 %v36, 0.6931472
  %v38 = vmul.f32 -0.5, %v32
  %v39 = vadd.f32 %v38, 1.0
  %v40 = vmul.f32 %v39, %v32
  %v41 = vand.u32 2147483647, %v32
  %vm42 = vcmp.lt.f32.partialorder %v41, 0.0004427343
  %v43 = vsel %vm42, %v40, %v37
  %v44 = vadd.f32 %v34, 1.0
  %v45 = vlog2.pop %v44
  %v46 = vmul.f32 %v45, 0.6931472
  %v47 = vmul.f32 -0.5, %v34
  %v48 = vadd.f32 %v47, 1.0
  %v49 = vmul.f32 %v48, %v34
  %v50 = vand.u32 2147483647, %v34
  %vm51 = vcmp.lt.f32.partialorder %v50, 0.0004427343
  %v52 = vsel %vm51, %v49, %v46
  %v53 = vadd.f32 %v25, %v43
  %v54 = vadd.f32 %v26, %v52
  %v55 = vadd.f32 %v53, %v54
  %v56 = vadd.f32 %v16, %v55
  %57 = vst [vmem:[%s2] sm:$0xff] %v56
  // Predicated region
  $region14: #{binary_loss_weighted.1} parent=0 // pred_check
    _
  $region15: #{binary_loss_weighted.1} parent=0 // pred_check_branch
    %59 = sbr.rel (0) target = $region17
  $region16: #{binary_loss_weighted.1} parent=0 // pred_region
    _
  $region17: #{binary_loss_weighted.1} parent=0 // pred_fallthru
    _
  // Predicated region
  $region18: #{binary_loss_weighted.1} parent=0 // pred_check
    _
  $region19: #{binary_loss_weighted.1} parent=0 // pred_check_branch
    %61 = sbr.rel (0) target = $region21
  $region20: #{binary_loss_weighted.1} parent=0 // pred_region
    _
  $region21: #{binary_loss_weighted.1} parent=0 // pred_fallthru
    _

</llo_original>
